<compile_context>
chip_gen: v7x
topology: tpu7x:2x2x1
jax: 0.10.0
libtpu: 0.0.40
codegen_flags: <defaults>
</compile_context>

<pallas_src>
import functools

import jax
import jax.numpy as jnp
from jax import lax
from jax.experimental import pallas as pl
from jax.experimental.pallas import tpu as pltpu


def _l2_normalize(x):
    # matches F.normalize(x, dim=1): x / max(||x||_2, 1e-12)
    sq = jnp.sum(x * x, axis=1, keepdims=True)
    return x * lax.rsqrt(jnp.maximum(sq, 1e-24))


def _nt_xent_tile_kernel(temp_ref, xi_ref, xj_ref, ai_ref, aj_ref, out_ref,
                         *, matmul_dtype):
    # temp_ref : SMEM (1, 1) f32   -- temperature
    # xi_ref   : VMEM (tq, Dp) f32 -- current row tile of emb_i
    # xj_ref   : VMEM (tq, Dp) f32 -- current row tile of emb_j (same pairs)
    # ai_ref   : VMEM (B,  Dp) f32 -- all emb_i rows (similarity columns)
    # aj_ref   : VMEM (B,  Dp) f32 -- all emb_j rows (similarity columns)
    # out_ref  : VMEM (tq, 1)  f32 -- per-pair loss (i-view row + j-view row)
    inv_t = 1.0 / temp_ref[0, 0]

    zi = _l2_normalize(xi_ref[...].astype(jnp.float32))   # (tq, Dp)
    zj = _l2_normalize(xj_ref[...].astype(jnp.float32))   # (tq, Dp)
    zci = _l2_normalize(ai_ref[...].astype(jnp.float32))  # (B, Dp)
    zcj = _l2_normalize(aj_ref[...].astype(jnp.float32))  # (B, Dp)

    # positives: sim[k, k+B] == sim[k+B, k] == <z_i[k], z_j[k]>   (VPU, f32)
    pos = jnp.sum(zi * zj, axis=1, keepdims=True) * inv_t          # (tq, 1)

    # self-similarity == exactly what sits on the masked diagonal
    # (1 for nonzero rows, 0 for all-zero rows -> matches the reference mask).
    self_i = jnp.sum(zi * zi, axis=1, keepdims=True) * inv_t       # (tq, 1)
    self_j = jnp.sum(zj * zj, axis=1, keepdims=True) * inv_t       # (tq, 1)

    dims = (((1,), (1,)), ((), ()))   # contract last dim of both -> no transpose

    def sim(a, b):
        return lax.dot_general(a.astype(matmul_dtype), b.astype(matmul_dtype),
                               dims, preferred_element_type=jnp.float32) * inv_t

    s_ii = sim(zi, zci)   # (tq, B)  i-view rows vs i-view columns
    s_ij = sim(zi, zcj)   # (tq, B)  i-view rows vs j-view columns
    s_ji = sim(zj, zci)   # (tq, B)
    s_jj = sim(zj, zcj)   # (tq, B)

    def log_denom(sa, sb, self_s):
        # log( sum_{k != self} exp(s_k) )  via stable log-sum-exp over the row
        m = jnp.maximum(jnp.max(sa, axis=1, keepdims=True),
                        jnp.max(sb, axis=1, keepdims=True))         # (tq, 1)
        tot = (jnp.sum(jnp.exp(sa - m), axis=1, keepdims=True)
               + jnp.sum(jnp.exp(sb - m), axis=1, keepdims=True)
               - jnp.exp(self_s - m))
        return m + jnp.log(tot)

    loss_i = log_denom(s_ii, s_ij, self_i) - pos                    # (tq, 1)
    loss_j = log_denom(s_ji, s_jj, self_j) - pos                    # (tq, 1)
    out_ref[...] = (loss_i + loss_j).astype(out_ref.dtype)


def _pick_row_tile(b):
    for t in (256, 128, 64, 32, 16, 8):
        if b % t == 0:
            return t
    return b   # small / odd batch: single full-row block (allowed: equals dim)


def contrastive_loss(emb_i, emb_j, temperature=0.5, *, use_bf16_matmul=False):
    """NT-Xent / SimCLR contrastive loss. emb_i, emb_j: (B, D) float arrays.

    use_bf16_matmul=True feeds the MXU bf16 operands (f32 accumulation) — the
    right choice on v6e/v7x when exact f32 matching is not required.
    """
    assert emb_i.shape == emb_j.shape and emb_i.ndim == 2
    b, d = emb_i.shape

    # lane-dense feature dim (zero padding changes neither norms nor dots)
    dp = max(128, ((d + 127) // 128) * 128)
    ei = jnp.asarray(emb_i, jnp.float32)
    ej = jnp.asarray(emb_j, jnp.float32)
    if dp != d:
        ei = jnp.pad(ei, ((0, 0), (0, dp - d)))
        ej = jnp.pad(ej, ((0, 0), (0, dp - d)))

    tq = _pick_row_tile(b)
    nb = b // tq
    temp = jnp.full((1, 1), temperature, dtype=jnp.float32)
    matmul_dtype = jnp.bfloat16 if use_bf16_matmul else jnp.float32

    kernel = functools.partial(_nt_xent_tile_kernel, matmul_dtype=matmul_dtype)

    pair_losses = pl.pallas_call(
        kernel,
        out_shape=jax.ShapeDtypeStruct((b, 1), jnp.float32),
        grid=(nb,),
        in_specs=[
            pl.BlockSpec(memory_space=pltpu.MemorySpace.SMEM),   # temperature
            pl.BlockSpec((tq, dp), lambda i: (i, 0)),            # emb_i row tile
            pl.BlockSpec((tq, dp), lambda i: (i, 0)),            # emb_j row tile
            pl.BlockSpec((b, dp), lambda i: (0, 0)),             # emb_i (columns)
            pl.BlockSpec((b, dp), lambda i: (0, 0)),             # emb_j (columns)
        ],
        out_specs=pl.BlockSpec((tq, 1), lambda i: (i, 0)),
        compiler_params=pltpu.CompilerParams(
            dimension_semantics=("parallel",)),
    )(temp, ei, ej, ei, ej)

    # trivial O(B) glue: sum over all 2B rows / (2B)
    return jnp.sum(pair_losses) / jnp.float32(2 * b)


def _reference_loss(emb_i, emb_j, temperature=0.5):
    """Pure-JAX reference mirroring the PyTorch module."""
    def normalize(x):
        return x / jnp.maximum(jnp.linalg.norm(x, axis=1, keepdims=True), 1e-12)
    b = emb_i.shape[0]
    z = jnp.concatenate([normalize(emb_i), normalize(emb_j)], axis=0)
    sim = z @ z.T
    sim_ij = jnp.diagonal(sim, offset=b)
    sim_ji = jnp.diagonal(sim, offset=-b)
    positives = jnp.concatenate([sim_ij, sim_ji], axis=0)
    neg_mask = 1.0 - jnp.eye(2 * b)
    nominator = jnp.exp(positives / temperature)
    denominator = jnp.sum(neg_mask * jnp.exp(sim / temperature), axis=1)
    return jnp.sum(-jnp.log(nominator / denominator)) / (2 * b)


if __name__ == "__main__":
    key = jax.random.PRNGKey(0)
    k1, k2, k3, k4 = jax.random.split(key, 4)

    # shapes implied by the module: two (batch, dim) embedding batches
    batch_size, dim = 4, 32
    emb_i = jax.random.normal(k1, (batch_size, dim), dtype=jnp.float32)
    emb_j = jax.random.normal(k2, (batch_size, dim), dtype=jnp.float32)

    loss = jax.block_until_ready(contrastive_loss(emb_i, emb_j, temperature=0.5))
    ref = jax.block_until_ready(_reference_loss(emb_i, emb_j, temperature=0.5))
    assert jnp.isfinite(loss), "loss is not finite"
    assert jnp.allclose(loss, ref, rtol=1e-5, atol=1e-5), (loss, ref)

    # second (still small) check exercising the multi-tile grid path (nb=3)
    b2, d2 = 24, 40
    ei2 = jax.random.normal(k3, (b2, d2), dtype=jnp.float32)
    ej2 = jax.random.normal(k4, (b2, d2), dtype=jnp.float32)
    loss2 = jax.block_until_ready(contrastive_loss(ei2, ej2, temperature=0.5))
    ref2 = jax.block_until_ready(_reference_loss(ei2, ej2, temperature=0.5))
    assert jnp.allclose(loss2, ref2, rtol=1e-5, atol=1e-5), (loss2, ref2)

    print("KERNEL_OK")
</pallas_src>

<mosaic_0001>
module attributes {stable_mosaic.version = 11 : i64} {
  func.func @_nt_xent_tile_kernel(%arg0: i32, %arg1: memref<1x1xf32, #tpu.memory_space<smem>>, %arg2: memref<4x128xf32, #tpu.memory_space<vmem>>, %arg3: memref<4x128xf32, #tpu.memory_space<vmem>>, %arg4: memref<4x128xf32, #tpu.memory_space<vmem>>, %arg5: memref<4x128xf32, #tpu.memory_space<vmem>>, %arg6: memref<4x1xf32, #tpu.memory_space<vmem>>) attributes {dimension_semantics = [#tpu.dimension_semantics<parallel>], iteration_bounds = array<i64: 1>, scalar_prefetch = 0 : i64, scratch_operands = 0 : i64, tpu.core_type = #tpu.core_type<tc>, window_params = [{transform_indices = @transform_0, window_bounds = array<i64: 1, 1>}, {transform_indices = @transform_1, window_bounds = array<i64: 4, 128>}, {transform_indices = @transform_2, window_bounds = array<i64: 4, 128>}, {pipeline_mode = #tpu.pipeline_mode<synchronous>, transform_indices = @transform_3, window_bounds = array<i64: 4, 128>}, {pipeline_mode = #tpu.pipeline_mode<synchronous>, transform_indices = @transform_4, window_bounds = array<i64: 4, 128>}, {transform_indices = @transform_5, window_bounds = array<i64: 4, 1>}]} {
    %c0 = arith.constant 0 : index
    %c0_0 = arith.constant 0 : index
    %0 = memref.load %arg1[%c0, %c0_0] : memref<1x1xf32, #tpu.memory_space<smem>>
    %cst = arith.constant 1.000000e+00 : f32
    %1 = arith.divf %cst, %0 : f32
    %c0_1 = arith.constant 0 : index
    %c0_2 = arith.constant 0 : index
    %2 = vector.load %arg2[%c0_1, %c0_2] : memref<4x128xf32, #tpu.memory_space<vmem>>, vector<4x128xf32>
    %3 = arith.mulf %2, %2 : vector<4x128xf32>
    %cst_3 = arith.constant dense<0.000000e+00> : vector<4xf32>
    %4 = vector.multi_reduction <add>, %3, %cst_3 [1] : vector<4x128xf32> to vector<4xf32>
    %5 = vector.shape_cast %4 : vector<4xf32> to vector<4x1xf32>
    %cst_4 = arith.constant 1.000000e-24 : f32
    %6 = vector.broadcast %cst_4 : f32 to vector<4x1xf32>
    %7 = arith.maximumf %5, %6 : vector<4x1xf32>
    %8 = math.rsqrt %7 : vector<4x1xf32>
    %9 = vector.broadcast %8 : vector<4x1xf32> to vector<4x128xf32>
    %10 = arith.mulf %2, %9 : vector<4x128xf32>
    %c0_5 = arith.constant 0 : index
    %c0_6 = arith.constant 0 : index
    %11 = vector.load %arg3[%c0_5, %c0_6] : memref<4x128xf32, #tpu.memory_space<vmem>>, vector<4x128xf32>
    %12 = arith.mulf %11, %11 : vector<4x128xf32>
    %cst_7 = arith.constant dense<0.000000e+00> : vector<4xf32>
    %13 = vector.multi_reduction <add>, %12, %cst_7 [1] : vector<4x128xf32> to vector<4xf32>
    %14 = vector.shape_cast %13 : vector<4xf32> to vector<4x1xf32>
    %cst_8 = arith.constant 1.000000e-24 : f32
    %15 = vector.broadcast %cst_8 : f32 to vector<4x1xf32>
    %16 = arith.maximumf %14, %15 : vector<4x1xf32>
    %17 = math.rsqrt %16 : vector<4x1xf32>
    %18 = vector.broadcast %17 : vector<4x1xf32> to vector<4x128xf32>
    %19 = arith.mulf %11, %18 : vector<4x128xf32>
    %c0_9 = arith.constant 0 : index
    %c0_10 = arith.constant 0 : index
    %20 = vector.load %arg4[%c0_9, %c0_10] : memref<4x128xf32, #tpu.memory_space<vmem>>, vector<4x128xf32>
    %21 = arith.mulf %20, %20 : vector<4x128xf32>
    %cst_11 = arith.constant dense<0.000000e+00> : vector<4xf32>
    %22 = vector.multi_reduction <add>, %21, %cst_11 [1] : vector<4x128xf32> to vector<4xf32>
    %23 = vector.shape_cast %22 : vector<4xf32> to vector<4x1xf32>
    %cst_12 = arith.constant 1.000000e-24 : f32
    %24 = vector.broadcast %cst_12 : f32 to vector<4x1xf32>
    %25 = arith.maximumf %23, %24 : vector<4x1xf32>
    %26 = math.rsqrt %25 : vector<4x1xf32>
    %27 = vector.broadcast %26 : vector<4x1xf32> to vector<4x128xf32>
    %28 = arith.mulf %20, %27 : vector<4x128xf32>
    %c0_13 = arith.constant 0 : index
    %c0_14 = arith.constant 0 : index
    %29 = vector.load %arg5[%c0_13, %c0_14] : memref<4x128xf32, #tpu.memory_space<vmem>>, vector<4x128xf32>
    %30 = arith.mulf %29, %29 : vector<4x128xf32>
    %cst_15 = arith.constant dense<0.000000e+00> : vector<4xf32>
    %31 = vector.multi_reduction <add>, %30, %cst_15 [1] : vector<4x128xf32> to vector<4xf32>
    %32 = vector.shape_cast %31 : vector<4xf32> to vector<4x1xf32>
    %cst_16 = arith.constant 1.000000e-24 : f32
    %33 = vector.broadcast %cst_16 : f32 to vector<4x1xf32>
    %34 = arith.maximumf %32, %33 : vector<4x1xf32>
    %35 = math.rsqrt %34 : vector<4x1xf32>
    %36 = vector.broadcast %35 : vector<4x1xf32> to vector<4x128xf32>
    %37 = arith.mulf %29, %36 : vector<4x128xf32>
    %38 = arith.mulf %10, %19 : vector<4x128xf32>
    %cst_17 = arith.constant dense<0.000000e+00> : vector<4xf32>
    %39 = vector.multi_reduction <add>, %38, %cst_17 [1] : vector<4x128xf32> to vector<4xf32>
    %40 = vector.shape_cast %39 : vector<4xf32> to vector<4x1xf32>
    %41 = vector.broadcast %1 : f32 to vector<4x1xf32>
    %42 = arith.mulf %40, %41 : vector<4x1xf32>
    %43 = arith.mulf %10, %10 : vector<4x128xf32>
    %cst_18 = arith.constant dense<0.000000e+00> : vector<4xf32>
    %44 = vector.multi_reduction <add>, %43, %cst_18 [1] : vector<4x128xf32> to vector<4xf32>
    %45 = vector.shape_cast %44 : vector<4xf32> to vector<4x1xf32>
    %46 = vector.broadcast %1 : f32 to vector<4x1xf32>
    %47 = arith.mulf %45, %46 : vector<4x1xf32>
    %48 = arith.mulf %19, %19 : vector<4x128xf32>
    %cst_19 = arith.constant dense<0.000000e+00> : vector<4xf32>
    %49 = vector.multi_reduction <add>, %48, %cst_19 [1] : vector<4x128xf32> to vector<4xf32>
    %50 = vector.shape_cast %49 : vector<4xf32> to vector<4x1xf32>
    %51 = vector.broadcast %1 : f32 to vector<4x1xf32>
    %52 = arith.mulf %50, %51 : vector<4x1xf32>
    %cst_20 = arith.constant dense<0.000000e+00> : vector<4x4xf32>
    %53 = tpu.matmul %10, %28, %cst_20 {dimension_numbers = #tpu.dot_dimension_numbers<[1], [1], [0], [0], [0, 0, 1, 0], [], []>} : vector<4x128xf32>, vector<4x128xf32>, vector<4x4xf32> -> vector<4x4xf32>
    %54 = vector.broadcast %1 : f32 to vector<4x4xf32>
    %55 = arith.mulf %53, %54 : vector<4x4xf32>
    %cst_21 = arith.constant dense<0.000000e+00> : vector<4x4xf32>
    %56 = tpu.matmul %10, %37, %cst_21 {dimension_numbers = #tpu.dot_dimension_numbers<[1], [1], [0], [0], [0, 0, 1, 0], [], []>} : vector<4x128xf32>, vector<4x128xf32>, vector<4x4xf32> -> vector<4x4xf32>
    %57 = vector.broadcast %1 : f32 to vector<4x4xf32>
    %58 = arith.mulf %56, %57 : vector<4x4xf32>
    %cst_22 = arith.constant dense<0.000000e+00> : vector<4x4xf32>
    %59 = tpu.matmul %19, %28, %cst_22 {dimension_numbers = #tpu.dot_dimension_numbers<[1], [1], [0], [0], [0, 0, 1, 0], [], []>} : vector<4x128xf32>, vector<4x128xf32>, vector<4x4xf32> -> vector<4x4xf32>
    %60 = vector.broadcast %1 : f32 to vector<4x4xf32>
    %61 = arith.mulf %59, %60 : vector<4x4xf32>
    %cst_23 = arith.constant dense<0.000000e+00> : vector<4x4xf32>
    %62 = tpu.matmul %19, %37, %cst_23 {dimension_numbers = #tpu.dot_dimension_numbers<[1], [1], [0], [0], [0, 0, 1, 0], [], []>} : vector<4x128xf32>, vector<4x128xf32>, vector<4x4xf32> -> vector<4x4xf32>
    %63 = vector.broadcast %1 : f32 to vector<4x4xf32>
    %64 = arith.mulf %62, %63 : vector<4x4xf32>
    %cst_24 = arith.constant dense<0xFF800000> : vector<4xf32>
    %65 = vector.multi_reduction <maximumf>, %55, %cst_24 [1] : vector<4x4xf32> to vector<4xf32>
    %66 = vector.shape_cast %65 : vector<4xf32> to vector<4x1xf32>
    %cst_25 = arith.constant dense<0xFF800000> : vector<4xf32>
    %67 = vector.multi_reduction <maximumf>, %58, %cst_25 [1] : vector<4x4xf32> to vector<4xf32>
    %68 = vector.shape_cast %67 : vector<4xf32> to vector<4x1xf32>
    %69 = arith.maximumf %66, %68 : vector<4x1xf32>
    %70 = vector.broadcast %69 : vector<4x1xf32> to vector<4x4xf32>
    %71 = arith.subf %55, %70 : vector<4x4xf32>
    %72 = math.exp %71 : vector<4x4xf32>
    %cst_26 = arith.constant dense<0.000000e+00> : vector<4xf32>
    %73 = vector.multi_reduction <add>, %72, %cst_26 [1] : vector<4x4xf32> to vector<4xf32>
    %74 = vector.shape_cast %73 : vector<4xf32> to vector<4x1xf32>
    %75 = vector.broadcast %69 : vector<4x1xf32> to vector<4x4xf32>
    %76 = arith.subf %58, %75 : vector<4x4xf32>
    %77 = math.exp %76 : vector<4x4xf32>
    %cst_27 = arith.constant dense<0.000000e+00> : vector<4xf32>
    %78 = vector.multi_reduction <add>, %77, %cst_27 [1] : vector<4x4xf32> to vector<4xf32>
    %79 = vector.shape_cast %78 : vector<4xf32> to vector<4x1xf32>
    %80 = arith.addf %74, %79 : vector<4x1xf32>
    %81 = arith.subf %47, %69 : vector<4x1xf32>
    %82 = math.exp %81 : vector<4x1xf32>
    %83 = arith.subf %80, %82 : vector<4x1xf32>
    %84 = math.log %83 : vector<4x1xf32>
    %85 = arith.addf %69, %84 : vector<4x1xf32>
    %86 = arith.subf %85, %42 : vector<4x1xf32>
    %cst_28 = arith.constant dense<0xFF800000> : vector<4xf32>
    %87 = vector.multi_reduction <maximumf>, %61, %cst_28 [1] : vector<4x4xf32> to vector<4xf32>
    %88 = vector.shape_cast %87 : vector<4xf32> to vector<4x1xf32>
    %cst_29 = arith.constant dense<0xFF800000> : vector<4xf32>
    %89 = vector.multi_reduction <maximumf>, %64, %cst_29 [1] : vector<4x4xf32> to vector<4xf32>
    %90 = vector.shape_cast %89 : vector<4xf32> to vector<4x1xf32>
    %91 = arith.maximumf %88, %90 : vector<4x1xf32>
    %92 = vector.broadcast %91 : vector<4x1xf32> to vector<4x4xf32>
    %93 = arith.subf %61, %92 : vector<4x4xf32>
    %94 = math.exp %93 : vector<4x4xf32>
    %cst_30 = arith.constant dense<0.000000e+00> : vector<4xf32>
    %95 = vector.multi_reduction <add>, %94, %cst_30 [1] : vector<4x4xf32> to vector<4xf32>
    %96 = vector.shape_cast %95 : vector<4xf32> to vector<4x1xf32>
    %97 = vector.broadcast %91 : vector<4x1xf32> to vector<4x4xf32>
    %98 = arith.subf %64, %97 : vector<4x4xf32>
    %99 = math.exp %98 : vector<4x4xf32>
    %cst_31 = arith.constant dense<0.000000e+00> : vector<4xf32>
    %100 = vector.multi_reduction <add>, %99, %cst_31 [1] : vector<4x4xf32> to vector<4xf32>
    %101 = vector.shape_cast %100 : vector<4xf32> to vector<4x1xf32>
    %102 = arith.addf %96, %101 : vector<4x1xf32>
    %103 = arith.subf %52, %91 : vector<4x1xf32>
    %104 = math.exp %103 : vector<4x1xf32>
    %105 = arith.subf %102, %104 : vector<4x1xf32>
    %106 = math.log %105 : vector<4x1xf32>
    %107 = arith.addf %91, %106 : vector<4x1xf32>
    %108 = arith.subf %107, %42 : vector<4x1xf32>
    %109 = arith.addf %86, %108 : vector<4x1xf32>
    %c0_32 = arith.constant 0 : index
    %c0_33 = arith.constant 0 : index
    %110 = vector.load %arg6[%c0_32, %c0_33] : memref<4x1xf32, #tpu.memory_space<vmem>>, vector<4x1xf32>
    tpu.vector_store %arg6[%c0_32, %c0_33], %109 {strides = array<i32>} : memref<4x1xf32, #tpu.memory_space<vmem>>, vector<4x1xf32>,
    return
  }
  func.func @transform_0(%arg0: i32) -> (i32, i32) {
    %c0_i32 = arith.constant 0 : i32
    %c0_i32_0 = arith.constant 0 : i32
    %c0_i32_1 = arith.constant 0 : i32
    return %c0_i32, %c0_i32_0 : i32, i32
  }
  func.func @transform_1(%arg0: i32) -> (i32, i32) {
    %c0_i32 = arith.constant 0 : i32
    %c0_i32_0 = arith.constant 0 : i32
    return %arg0, %c0_i32 : i32, i32
  }
  func.func @transform_2(%arg0: i32) -> (i32, i32) {
    %c0_i32 = arith.constant 0 : i32
    %c0_i32_0 = arith.constant 0 : i32
    return %arg0, %c0_i32 : i32, i32
  }
  func.func @transform_3(%arg0: i32) -> (i32, i32) {
    %c0_i32 = arith.constant 0 : i32
    %c0_i32_0 = arith.constant 0 : i32
    %c0_i32_1 = arith.constant 0 : i32
    return %c0_i32, %c0_i32_0 : i32, i32
  }
  func.func @transform_4(%arg0: i32) -> (i32, i32) {
    %c0_i32 = arith.constant 0 : i32
    %c0_i32_0 = arith.constant 0 : i32
    %c0_i32_1 = arith.constant 0 : i32
    return %c0_i32, %c0_i32_0 : i32, i32
  }
  func.func @transform_5(%arg0: i32) -> (i32, i32) {
    %c0_i32 = arith.constant 0 : i32
    %c0_i32_0 = arith.constant 0 : i32
    return %arg0, %c0_i32 : i32, i32
  }
}

</mosaic_0001>

<llo_original>
// kernel: tpu_custom_call.1
$region0: #{tpu_custom_call.1}
  #allocation0 [shape = 'u32[]', space=smem, size = 0x4, offset = 0x4, fixed_abs, tag = 'smem constant byte address 0x4 - core index']
  #allocation1 [shape = 'u32[144,128]{1,0:T(1,128)}', space=vmem, size = 0x12000, scoped, tag = 'internal scratch']
  #allocation2 [shape = 'f32[1,1]{1,0:T(1,128)S(6)}', space=smem, size = 0x200, scoped, tag = 'scoped memory for tpu_custom_call.1']
  %s0 = inlined_call_operand.<no memory space> [shape: f32[1,1], index: 0, kind: input, shape index: {}]
  %s1 = inlined_call_operand.hbm [shape: f32[4,128], index: 1, kind: input, shape index: {}]
  %s2 = inlined_call_operand.vmem [shape: f32[4,128], index: 2, kind: input, shape index: {}]
  %s3 = inlined_call_operand.vmem [shape: f32[4,128], index: 3, kind: input, shape index: {}]
  %s4 = inlined_call_operand.vmem [shape: f32[4,128], index: 4, kind: input, shape index: {}]
  %s5 = inlined_call_operand.vmem [shape: f32[4,1], index: 5, kind: output, shape index: {}]
  %s6 = sld [smem:[#allocation0]]
  $region34: #{tpu_custom_call.1} parent=0
    _
  %s8 = ssub.s32 1, %s6
  %s9 = scalar_select 0, %s8, %s6
  %10 = sst [smem:[#allocation2]] %s0
  $region1: #{tpu_custom_call.1} parent=0
    #allocation3 [shape = 'u8[2048]{0}', space=vmem, size = 0x800, scoped, tag = 'input window, operand 1, single buffered']
    #allocation4 [shape = 's32[1]{0}', space=sflag, size = 0x4, scoped, tag = 'scoped memory for tpu_custom_call.1']
    %11 = vsyncpa [#allocation4], 0
    // Predicated region
    $region2: #{tpu_custom_call.1} parent=1 // pred_check
      _
    $region3: #{tpu_custom_call.1} parent=1 // pred_check_branch
      %13 = sbr.rel (0) target = $region5
    $region4: #{tpu_custom_call.1} parent=1 // pred_region
      _
    $region5: #{tpu_custom_call.1} parent=1 // pred_fallthru
      _
    // Predicated region
    $region6: #{tpu_custom_call.1} parent=1 // pred_check
      _
    $region7: #{tpu_custom_call.1} parent=1 // pred_check_branch
      %15 = sbr.rel (0) target = $region9
    $region8: #{tpu_custom_call.1} parent=1 // pred_region
      %s17 = ssub.s32 64, 64
      %18 = vsyncadd [#allocation4], %s17
      %s20 = sshll.u32 [#allocation3], 4
      %s21 = int_to_ptr.vmem [resolvable:$true] %s20
      %23 = dma.hbm_to_vmem [thread:$0]  %s1, 64, %s21, [#allocation4]
    $region9: #{tpu_custom_call.1} parent=1 // pred_fallthru
      _
    // Predicated region
    $region10: #{tpu_custom_call.1} parent=1 // pred_check
      _
    $region11: #{tpu_custom_call.1} parent=1 // pred_check_branch
      %25 = sbr.rel (0) target = $region13
    $region12: #{tpu_custom_call.1} parent=1 // pred_region
      _
    $region13: #{tpu_custom_call.1} parent=1 // pred_fallthru
      _
    // Predicated region
    $region14: #{tpu_custom_call.1} parent=1 // pred_check
      _
    $region15: #{tpu_custom_call.1} parent=1 // pred_check_branch
      %27 = sbr.rel (0) target = $region17
    $region16: #{tpu_custom_call.1} parent=1 // pred_region
      _
    $region17: #{tpu_custom_call.1} parent=1 // pred_fallthru
      _
    // Predicated region
    $region18: #{tpu_custom_call.1} parent=1 // pred_check
      _
    $region19: #{tpu_custom_call.1} parent=1 // pred_check_branch
      %29 = sbr.rel (0) target = $region21
    $region20: #{tpu_custom_call.1} parent=1 // pred_region
      _
    $region21: #{tpu_custom_call.1} parent=1 // pred_fallthru
      _
    // Predicated region
    $region22: #{tpu_custom_call.1} parent=1 // pred_check
      _
    $region23: #{tpu_custom_call.1} parent=1 // pred_check_branch
      %31 = sbr.rel (0) target = $region25
    $region24: #{tpu_custom_call.1} parent=1 // pred_region
      %32 = dma.done [#allocation4], 64
    $region25: #{tpu_custom_call.1} parent=1 // pred_fallthru
      _
    %s33 = sld [smem:[#allocation2]]
    %v34 = vstv %s33
    %v35 = vrcp.pop %v34
    %s36 = vtos %v35
    %v37 = vld [vmem:[#allocation3] sm:$0xf]
    %v38 = vmul.f32 %v37, %v37
    %vm39 = vcmask 1043456
    %v40 = vsel %vm39, %v38, 0.0
    %41 = vadd.xlane.f32.xlu0 %v40
    %v42 = vpop.xlane.xlu0 %41
    %v43 = vmax.f32 %v42, 1e-24
    %v44 = vrsqrt.pop %v43
    %v45 = vmul.f32 %v37, %v44
    %v46 = vld [vmem:[%s2] sm:$0xf]
    %v47 = vmul.f32 %v46, %v46
    %v48 = vsel %vm39, %v47, 0.0
    %49 = vadd.xlane.f32.xlu0 %v48
    %v50 = vpop.xlane.xlu0 %49
    %v51 = vmax.f32 %v50, 1e-24
    %v52 = vrsqrt.pop %v51
    %v53 = vmul.f32 %v46, %v52
    %v54 = vld [vmem:[%s3] sm:$0xf]
    %v55 = vmul.f32 %v54, %v54
    %v56 = vsel %vm39, %v55, 0.0
    %57 = vadd.xlane.f32.xlu0 %v56
    %v58 = vpop.xlane.xlu0 %57
    %v59 = vmax.f32 %v58, 1e-24
    %v60 = vrsqrt.pop %v59
    %v61 = vmul.f32 %v54, %v60
    %v62 = vld [vmem:[%s4] sm:$0xf]
    %v63 = vmul.f32 %v62, %v62
    %v64 = vsel %vm39, %v63, 0.0
    %65 = vadd.xlane.f32.xlu0 %v64
    %v66 = vpop.xlane.xlu0 %65
    %v67 = vmax.f32 %v66, 1e-24
    %v68 = vrsqrt.pop %v67
    %v69 = vmul.f32 %v62, %v68
    %v70 = vmul.f32 %v45, %v53
    %v71 = vsel %vm39, %v70, 0.0
    %72 = vadd.xlane.f32.xlu0 %v71
    %v73 = vpop.xlane.xlu0 %72
    %v74 = vstv %s36
    %v75 = vmul.f32 %v73, %v74
    %v76 = vmul.f32 %v45, %v45
    %v77 = vsel %vm39, %v76, 0.0
    %78 = vadd.xlane.f32.xlu0 %v77
    %v79 = vpop.xlane.xlu0 %78
    %v80 = vmul.f32 %v79, %v74
    %v81 = vmul.f32 %v53, %v53
    %v82 = vsel %vm39, %v81, 0.0
    %83 = vadd.xlane.f32.xlu0 %v82
    %v84 = vpop.xlane.xlu0 %83
    %v85 = vmul.f32 %v84, %v74
    %86 = vmatprep.subr.mxu0 0.0
    %87 = vmatpush1.xpose.msra.mxu0 %v61
    %88 = vmatprep.subr.mxu0 0.0
    %89 = vmatpush1.xpose.msra.mxu0 0.0
    %90 = vmatprep.subr.mxu0 0.0
    %91 = vmatpush1.xpose.msra.mxu0 0.0
    %92 = vmatprep.subr.mxu0 0.0
    %93 = vmatpush1.xpose.msra.mxu0 0.0
    %94 = vmatprep.subr.mxu0 0.0
    %95 = vmatpush1.xpose.msra.mxu0 0.0
    %96 = vmatprep.subr.mxu0 0.0
    %97 = vmatpush1.xpose.msra.mxu0 0.0
    %98 = vmatprep.subr.mxu0 0.0
    %99 = vmatpush1.xpose.msra.mxu0 0.0
    %100 = vmatprep.subr.mxu0 0.0
    %101 = vmatpush1.xpose.msra.mxu0 0.0
    %102 = vmatprep.subr.mxu0 0.0
    %103 = vmatpush1.xpose.msra.mxu0 0.0
    %104 = vmatprep.subr.mxu0 0.0
    %105 = vmatpush1.xpose.msra.mxu0 0.0
    %106 = vmatprep.subr.mxu0 0.0
    %107 = vmatpush1.xpose.msra.mxu0 0.0
    %108 = vmatprep.subr.mxu0 0.0
    %109 = vmatpush1.xpose.msra.mxu0 0.0
    %110 = vmatprep.subr.mxu0 0.0
    %111 = vmatpush1.xpose.msra.mxu0 0.0
    %112 = vmatprep.subr.mxu0 0.0
    %113 = vmatpush1.xpose.msra.mxu0 0.0
    %114 = vmatprep.subr.mxu0 0.0
    %115 = vmatpush1.xpose.msra.mxu0 0.0
    %116 = vmatprep.subr.mxu0 0.0
    %117 = vmatpush1.xpose.msra.mxu0 0.0
    %118 = vmatprep.subr.mxu0 0.0
    %119 = vmatpush1.xpose.msra.mxu0 0.0
    %120 = vmatprep.subr.mxu0 0.0
    %121 = vmatpush1.xpose.msra.mxu0 0.0
    %122 = vmatprep.subr.mxu0 0.0
    %123 = vmatpush1.xpose.msra.mxu0 0.0
    %124 = vmatprep.subr.mxu0 0.0
    %125 = vmatpush1.xpose.msra.mxu0 0.0
    %126 = vmatprep.subr.mxu0 0.0
    %127 = vmatpush1.xpose.msra.mxu0 0.0
    %128 = vmatprep.subr.mxu0 0.0
    %129 = vmatpush1.xpose.msra.mxu0 0.0
    %130 = vmatprep.subr.mxu0 0.0
    %131 = vmatpush1.xpose.msra.mxu0 0.0
    %132 = vmatprep.subr.mxu0 0.0
    %133 = vmatpush1.xpose.msra.mxu0 0.0
    %134 = vmatprep.subr.mxu0 0.0
    %135 = vmatpush1.xpose.msra.mxu0 0.0
    %136 = vmatprep.subr.mxu0 0.0
    %137 = vmatpush1.xpose.msra.mxu0 0.0
    %138 = vmatprep.subr.mxu0 0.0
    %139 = vmatpush1.xpose.msra.mxu0 0.0
    %140 = vmatprep.subr.mxu0 0.0
    %141 = vmatpush1.xpose.msra.mxu0 0.0
    %142 = vmatprep.subr.mxu0 0.0
    %143 = vmatpush1.xpose.msra.mxu0 0.0
    %144 = vmatprep.subr.mxu0 0.0
    %145 = vmatpush1.xpose.msra.mxu0 0.0
    %146 = vmatprep.subr.mxu0 0.0
    %147 = vmatpush1.xpose.msra.mxu0 0.0
    %148 = vmatprep.subr.mxu0 0.0
    %149 = vmatpush1.xpose.msra.mxu0 0.0
    %150 = vmatprep.mubr.f32.mxu0 0.0
    %151 = vmatmul.mubr.f32.gmra.mrb[0].mxu0 %v45
    %v152 = vpop.f32.mrb[0].mxu0
    %v153 = vadd.f32 0.0, %v152
    %v154 = vpop.f32.mrb[0].mxu0
    %155 = vdwg.mxu0
    %v156 = vmul.f32 %v153, %v74
    %157 = vmatprep.subr.mxu0 0.0
    %158 = vmatpush1.xpose.msra.mxu0 %v69
    %159 = vmatprep.subr.mxu0 0.0
    %160 = vmatpush1.xpose.msra.mxu0 0.0
    %161 = vmatprep.subr.mxu0 0.0
    %162 = vmatpush1.xpose.msra.mxu0 0.0
    %163 = vmatprep.subr.mxu0 0.0
    %164 = vmatpush1.xpose.msra.mxu0 0.0
    %165 = vmatprep.subr.mxu0 0.0
    %166 = vmatpush1.xpose.msra.mxu0 0.0
    %167 = vmatprep.subr.mxu0 0.0
    %168 = vmatpush1.xpose.msra.mxu0 0.0
    %169 = vmatprep.subr.mxu0 0.0
    %170 = vmatpush1.xpose.msra.mxu0 0.0
    %171 = vmatprep.subr.mxu0 0.0
    %172 = vmatpush1.xpose.msra.mxu0 0.0
    %173 = vmatprep.subr.mxu0 0.0
    %174 = vmatpush1.xpose.msra.mxu0 0.0
    %175 = vmatprep.subr.mxu0 0.0
    %176 = vmatpush1.xpose.msra.mxu0 0.0
    %177 = vmatprep.subr.mxu0 0.0
    %178 = vmatpush1.xpose.msra.mxu0 0.0
    %179 = vmatprep.subr.mxu0 0.0
    %180 = vmatpush1.xpose.msra.mxu0 0.0
    %181 = vmatprep.subr.mxu0 0.0
    %182 = vmatpush1.xpose.msra.mxu0 0.0
    %183 = vmatprep.subr.mxu0 0.0
    %184 = vmatpush1.xpose.msra.mxu0 0.0
    %185 = vmatprep.subr.mxu0 0.0
    %186 = vmatpush1.xpose.msra.mxu0 0.0
    %187 = vmatprep.subr.mxu0 0.0
    %188 = vmatpush1.xpose.msra.mxu0 0.0
    %189 = vmatprep.subr.mxu0 0.0
    %190 = vmatpush1.xpose.msra.mxu0 0.0
    %191 = vmatprep.subr.mxu0 0.0
    %192 = vmatpush1.xpose.msra.mxu0 0.0
    %193 = vmatprep.subr.mxu0 0.0
    %194 = vmatpush1.xpose.msra.mxu0 0.0
    %195 = vmatprep.subr.mxu0 0.0
    %196 = vmatpush1.xpose.msra.mxu0 0.0
    %197 = vmatprep.subr.mxu0 0.0
    %198 = vmatpush1.xpose.msra.mxu0 0.0
    %199 = vmatprep.subr.mxu0 0.0
    %200 = vmatpush1.xpose.msra.mxu0 0.0
    %201 = vmatprep.subr.mxu0 0.0
    %202 = vmatpush1.xpose.msra.mxu0 0.0
    %203 = vmatprep.subr.mxu0 0.0
    %204 = vmatpush1.xpose.msra.mxu0 0.0
    %205 = vmatprep.subr.mxu0 0.0
    %206 = vmatpush1.xpose.msra.mxu0 0.0
    %207 = vmatprep.subr.mxu0 0.0
    %208 = vmatpush1.xpose.msra.mxu0 0.0
    %209 = vmatprep.subr.mxu0 0.0
    %210 = vmatpush1.xpose.msra.mxu0 0.0
    %211 = vmatprep.subr.mxu0 0.0
    %212 = vmatpush1.xpose.msra.mxu0 0.0
    %213 = vmatprep.subr.mxu0 0.0
    %214 = vmatpush1.xpose.msra.mxu0 0.0
    %215 = vmatprep.subr.mxu0 0.0
    %216 = vmatpush1.xpose.msra.mxu0 0.0
    %217 = vmatprep.subr.mxu0 0.0
    %218 = vmatpush1.xpose.msra.mxu0 0.0
    %219 = vmatprep.subr.mxu0 0.0
    %220 = vmatpush1.xpose.msra.mxu0 0.0
    %221 = vmatprep.mubr.f32.mxu0 0.0
    %222 = vmatmul.mubr.f32.gmra.mrb[0].mxu0 %v45
    %v223 = vpop.f32.mrb[0].mxu0
    %v224 = vadd.f32 0.0, %v223
    %v225 = vpop.f32.mrb[0].mxu0
    %226 = vdwg.mxu0
    %v227 = vmul.f32 %v224, %v74
    %228 = vmatprep.subr.mxu0 0.0
    %229 = vmatpush1.xpose.msra.mxu0 %v61
    %230 = vmatprep.subr.mxu0 0.0
    %231 = vmatpush1.xpose.msra.mxu0 0.0
    %232 = vmatprep.subr.mxu0 0.0
    %233 = vmatpush1.xpose.msra.mxu0 0.0
    %234 = vmatprep.subr.mxu0 0.0
    %235 = vmatpush1.xpose.msra.mxu0 0.0
    %236 = vmatprep.subr.mxu0 0.0
    %237 = vmatpush1.xpose.msra.mxu0 0.0
    %238 = vmatprep.subr.mxu0 0.0
    %239 = vmatpush1.xpose.msra.mxu0 0.0
    %240 = vmatprep.subr.mxu0 0.0
    %241 = vmatpush1.xpose.msra.mxu0 0.0
    %242 = vmatprep.subr.mxu0 0.0
    %243 = vmatpush1.xpose.msra.mxu0 0.0
    %244 = vmatprep.subr.mxu0 0.0
    %245 = vmatpush1.xpose.msra.mxu0 0.0
    %246 = vmatprep.subr.mxu0 0.0
    %247 = vmatpush1.xpose.msra.mxu0 0.0
    %248 = vmatprep.subr.mxu0 0.0
    %249 = vmatpush1.xpose.msra.mxu0 0.0
    %250 = vmatprep.subr.mxu0 0.0
    %251 = vmatpush1.xpose.msra.mxu0 0.0
    %252 = vmatprep.subr.mxu0 0.0
    %253 = vmatpush1.xpose.msra.mxu0 0.0
    %254 = vmatprep.subr.mxu0 0.0
    %255 = vmatpush1.xpose.msra.mxu0 0.0
    %256 = vmatprep.subr.mxu0 0.0
    %257 = vmatpush1.xpose.msra.mxu0 0.0
    %258 = vmatprep.subr.mxu0 0.0
    %259 = vmatpush1.xpose.msra.mxu0 0.0
    %260 = vmatprep.subr.mxu0 0.0
    %261 = vmatpush1.xpose.msra.mxu0 0.0
    %262 = vmatprep.subr.mxu0 0.0
    %263 = vmatpush1.xpose.msra.mxu0 0.0
    %264 = vmatprep.subr.mxu0 0.0
    %265 = vmatpush1.xpose.msra.mxu0 0.0
    %266 = vmatprep.subr.mxu0 0.0
    %267 = vmatpush1.xpose.msra.mxu0 0.0
    %268 = vmatprep.subr.mxu0 0.0
    %269 = vmatpush1.xpose.msra.mxu0 0.0
    %270 = vmatprep.subr.mxu0 0.0
    %271 = vmatpush1.xpose.msra.mxu0 0.0
    %272 = vmatprep.subr.mxu0 0.0
    %273 = vmatpush1.xpose.msra.mxu0 0.0
    %274 = vmatprep.subr.mxu0 0.0
    %275 = vmatpush1.xpose.msra.mxu0 0.0
    %276 = vmatprep.subr.mxu0 0.0
    %277 = vmatpush1.xpose.msra.mxu0 0.0
    %278 = vmatprep.subr.mxu0 0.0
    %279 = vmatpush1.xpose.msra.mxu0 0.0
    %280 = vmatprep.subr.mxu0 0.0
    %281 = vmatpush1.xpose.msra.mxu0 0.0
    %282 = vmatprep.subr.mxu0 0.0
    %283 = vmatpush1.xpose.msra.mxu0 0.0
    %284 = vmatprep.subr.mxu0 0.0
    %285 = vmatpush1.xpose.msra.mxu0 0.0
    %286 = vmatprep.subr.mxu0 0.0
    %287 = vmatpush1.xpose.msra.mxu0 0.0
    %288 = vmatprep.subr.mxu0 0.0
    %289 = vmatpush1.xpose.msra.mxu0 0.0
    %290 = vmatprep.subr.mxu0 0.0
    %291 = vmatpush1.xpose.msra.mxu0 0.0
    %292 = vmatprep.mubr.f32.mxu0 0.0
    %293 = vmatmul.mubr.f32.gmra.mrb[0].mxu0 %v53
    %v294 = vpop.f32.mrb[0].mxu0
    %v295 = vadd.f32 0.0, %v294
    %v296 = vpop.f32.mrb[0].mxu0
    %297 = vdwg.mxu0
    %v298 = vmul.f32 %v295, %v74
    %299 = vmatprep.subr.mxu0 0.0
    %300 = vmatpush1.xpose.msra.mxu0 %v69
    %301 = vmatprep.subr.mxu0 0.0
    %302 = vmatpush1.xpose.msra.mxu0 0.0
    %303 = vmatprep.subr.mxu0 0.0
    %304 = vmatpush1.xpose.msra.mxu0 0.0
    %305 = vmatprep.subr.mxu0 0.0
    %306 = vmatpush1.xpose.msra.mxu0 0.0
    %307 = vmatprep.subr.mxu0 0.0
    %308 = vmatpush1.xpose.msra.mxu0 0.0
    %309 = vmatprep.subr.mxu0 0.0
    %310 = vmatpush1.xpose.msra.mxu0 0.0
    %311 = vmatprep.subr.mxu0 0.0
    %312 = vmatpush1.xpose.msra.mxu0 0.0
    %313 = vmatprep.subr.mxu0 0.0
    %314 = vmatpush1.xpose.msra.mxu0 0.0
    %315 = vmatprep.subr.mxu0 0.0
    %316 = vmatpush1.xpose.msra.mxu0 0.0
    %317 = vmatprep.subr.mxu0 0.0
    %318 = vmatpush1.xpose.msra.mxu0 0.0
    %319 = vmatprep.subr.mxu0 0.0
    %320 = vmatpush1.xpose.msra.mxu0 0.0
    %321 = vmatprep.subr.mxu0 0.0
    %322 = vmatpush1.xpose.msra.mxu0 0.0
    %323 = vmatprep.subr.mxu0 0.0
    %324 = vmatpush1.xpose.msra.mxu0 0.0
    %325 = vmatprep.subr.mxu0 0.0
    %326 = vmatpush1.xpose.msra.mxu0 0.0
    %327 = vmatprep.subr.mxu0 0.0
    %328 = vmatpush1.xpose.msra.mxu0 0.0
    %329 = vmatprep.subr.mxu0 0.0
    %330 = vmatpush1.xpose.msra.mxu0 0.0
    %331 = vmatprep.subr.mxu0 0.0
    %332 = vmatpush1.xpose.msra.mxu0 0.0
    %333 = vmatprep.subr.mxu0 0.0
    %334 = vmatpush1.xpose.msra.mxu0 0.0
    %335 = vmatprep.subr.mxu0 0.0
    %336 = vmatpush1.xpose.msra.mxu0 0.0
    %337 = vmatprep.subr.mxu0 0.0
    %338 = vmatpush1.xpose.msra.mxu0 0.0
    %339 = vmatprep.subr.mxu0 0.0
    %340 = vmatpush1.xpose.msra.mxu0 0.0
    %341 = vmatprep.subr.mxu0 0.0
    %342 = vmatpush1.xpose.msra.mxu0 0.0
    %343 = vmatprep.subr.mxu0 0.0
    %344 = vmatpush1.xpose.msra.mxu0 0.0
    %345 = vmatprep.subr.mxu0 0.0
    %346 = vmatpush1.xpose.msra.mxu0 0.0
    %347 = vmatprep.subr.mxu0 0.0
    %348 = vmatpush1.xpose.msra.mxu0 0.0
    %349 = vmatprep.subr.mxu0 0.0
    %350 = vmatpush1.xpose.msra.mxu0 0.0
    %351 = vmatprep.subr.mxu0 0.0
    %352 = vmatpush1.xpose.msra.mxu0 0.0
    %353 = vmatprep.subr.mxu0 0.0
    %354 = vmatpush1.xpose.msra.mxu0 0.0
    %355 = vmatprep.subr.mxu0 0.0
    %356 = vmatpush1.xpose.msra.mxu0 0.0
    %357 = vmatprep.subr.mxu0 0.0
    %358 = vmatpush1.xpose.msra.mxu0 0.0
    %359 = vmatprep.subr.mxu0 0.0
    %360 = vmatpush1.xpose.msra.mxu0 0.0
    %361 = vmatprep.subr.mxu0 0.0
    %362 = vmatpush1.xpose.msra.mxu0 0.0
    %363 = vmatprep.mubr.f32.mxu0 0.0
    %364 = vmatmul.mubr.f32.gmra.mrb[0].mxu0 %v53
    %v365 = vpop.f32.mrb[0].mxu0
    %v366 = vadd.f32 0.0, %v365
    %v367 = vpop.f32.mrb[0].mxu0
    %368 = vdwg.mxu0
    %v369 = vmul.f32 %v366, %v74
    %vm370 = vcmask 27648
    %v371 = vsel %vm370, %v156, -inf
    %372 = vmax.xlane.f32.xlu0 %v371
    %v373 = vpop.xlane.xlu0 %372
    %v374 = vsel %vm370, %v227, -inf
    %375 = vmax.xlane.f32.xlu0 %v374
    %v376 = vpop.xlane.xlu0 %375
    %v377 = vmax.f32 %v373, %v376
    %v378 = vsub.f32 %v156, %v377
    %v379 = vmul.f32 %v378, 1.442695
    %v380 = vpow.pop %v379
    %v381 = vsel %vm370, %v380, 0.0
    %382 = vadd.xlane.f32.xlu0 %v381
    %v383 = vpop.xlane.xlu0 %382
    %v384 = vsub.f32 %v227, %v377
    %v385 = vmul.f32 %v384, 1.442695
    %v386 = vpow.pop %v385
    %v387 = vsel %vm370, %v386, 0.0
    %388 = vadd.xlane.f32.xlu0 %v387
    %v389 = vpop.xlane.xlu0 %388
    %v390 = vadd.f32 %v383, %v389
    %v391 = vsub.f32 %v80, %v377
    %v392 = vmul.f32 %v391, 1.442695
    %v393 = vpow.pop %v392
    %v394 = vsub.f32 %v390, %v393
    %v395 = vlog2.pop %v394
    %v396 = vmul.f32 %v395, 0.6931472
    %v397 = vadd.f32 %v377, %v396
    %v398 = vsub.f32 %v397, %v75
    %v399 = vsel %vm370, %v298, -inf
    %400 = vmax.xlane.f32.xlu0 %v399
    %v401 = vpop.xlane.xlu0 %400
    %v402 = vsel %vm370, %v369, -inf
    %403 = vmax.xlane.f32.xlu0 %v402
    %v404 = vpop.xlane.xlu0 %403
    %v405 = vmax.f32 %v401, %v404
    %v406 = vsub.f32 %v298, %v405
    %v407 = vmul.f32 %v406, 1.442695
    %v408 = vpow.pop %v407
    %v409 = vsel %vm370, %v408, 0.0
    %410 = vadd.xlane.f32.xlu0 %v409
    %v411 = vpop.xlane.xlu0 %410
    %v412 = vsub.f32 %v369, %v405
    %v413 = vmul.f32 %v412, 1.442695
    %v414 = vpow.pop %v413
    %v415 = vsel %vm370, %v414, 0.0
    %416 = vadd.xlane.f32.xlu0 %v415
    %v417 = vpop.xlane.xlu0 %416
    %v418 = vadd.f32 %v411, %v417
    %v419 = vsub.f32 %v85, %v405
    %v420 = vmul.f32 %v419, 1.442695
    %v421 = vpow.pop %v420
    %v422 = vsub.f32 %v418, %v421
    %v423 = vlog2.pop %v422
    %v424 = vmul.f32 %v423, 0.6931472
    %v425 = vadd.f32 %v405, %v424
    %v426 = vsub.f32 %v425, %v75
    %v427 = vadd.f32 %v398, %v426
    %vm428 = vcmask 3072
    %429 = vst.msk [vmem:[%s5] sm:$0xf] %vm428, %v427
    // Predicated region
    $region26: #{tpu_custom_call.1} parent=1 // pred_check
      _
    $region27: #{tpu_custom_call.1} parent=1 // pred_check_branch
      %431 = sbr.rel (0) target = $region29
    $region28: #{tpu_custom_call.1} parent=1 // pred_region
      _
    $region29: #{tpu_custom_call.1} parent=1 // pred_fallthru
      _
    // Predicated region
    $region30: #{tpu_custom_call.1} parent=1 // pred_check
      _
    $region31: #{tpu_custom_call.1} parent=1 // pred_check_branch
      %433 = sbr.rel (0) target = $region33
    $region32: #{tpu_custom_call.1} parent=1 // pred_region
      _
    $region33: #{tpu_custom_call.1} parent=1 // pred_fallthru
      _
    %434 = vsyncpa [#allocation4], 1

</llo_original>
